<compile_context>
chip_gen: v7x
topology: tpu7x:2x2x1
jax: 0.10.0
libtpu: 0.0.40
codegen_flags: <defaults>
</compile_context>

<pallas_src>
import jax
import jax.numpy as jnp
from jax.experimental import pallas as pl
from jax.experimental.pallas import tpu as pltpu


def shrinkage_kernel(x_ref, p_ref, o_ref):
    # x_ref : (Nt, C, L)            activation block (Nt samples)
    # p_ref : (C + 1, 2*MIP + 2)    resident param slab:
    #           [:C, :MIP]            = (BN-folded conv1 weight).T
    #           [C,  :MIP]            = BN-folded conv1 bias
    #           [:C, MIP:2MIP]        = conv2 weight
    #           [:C, 2MIP]            = conv2 bias
    #           [:C, 2MIP+1]          = a
    # o_ref : (Nt, C, L)
    Nt, C, L = x_ref.shape
    MIP = (p_ref.shape[1] - 2) // 2

    x = x_ref[...]                                             # native dtype (bf16 stays bf16)

    # AdaptiveAvgPool1d(1): per-(sample, channel) mean over L.  Accumulate in f32
    # (lane reduce; keepdims keeps C on sublanes so thr broadcasts over L freely).
    avg = jnp.mean(x.astype(jnp.float32), axis=-1, keepdims=True)        # (Nt, C, 1)

    w1t = p_ref[:C, :MIP]                                      # (C, MIP)  BN folded in
    b1 = p_ref[C:C + 1, :MIP]                                  # (1, MIP)  BN folded in
    w2 = p_ref[:C, MIP:2 * MIP]                                # (C, MIP)
    b2 = p_ref[:C, 2 * MIP:2 * MIP + 1]                        # (C, 1)
    a = p_ref[:C, 2 * MIP + 1:2 * MIP + 2]                     # (C, 1)

    # fc[0..2]: Conv1d(C->MIP, k=1) (+ folded BN) + ReLU, batched over Nt.
    # Tiny contraction -> VPU broadcast-multiply + sublane reduce (no 1-col MXU matmul).
    h = jnp.sum(w1t[None, :, :] * avg, axis=1, keepdims=True) + b1       # (Nt, 1, MIP)
    h = jnp.maximum(h, 0.0)

    # fc[3..4]: Conv1d(MIP->C, k=1) + Hardsigmoid == clamp(x/6 + 1/2, 0, 1).
    y = jnp.sum(w2[None, :, :] * h, axis=-1, keepdims=True) + b2         # (Nt, C, 1)
    y = jnp.clip(y * (1.0 / 6.0) + 0.5, 0.0, 1.0)

    # threshold = a * (average * gate); matches PyTorch (no clamp on thr).
    thr = (a * (avg * y)).astype(x.dtype)                                # (Nt, C, 1)

    # out = sign(x) * max(|x| - thr, 0), in the input dtype.  Two selects instead of
    # sign()*mul; x==0 case kept exact (returns 0 even when thr < 0).
    zero = jnp.zeros((), x.dtype)
    m = jnp.maximum(jnp.abs(x) - thr, zero)                              # (Nt, C, L)
    out = jnp.where(x > zero, m, jnp.where(x < zero, -m, zero))
    o_ref[...] = out.astype(o_ref.dtype)


def _pick_nt(n, per_sample_bytes, target_bytes=2 * 1024 * 1024):
    """Pick a batch-tile size giving ~2 MiB blocks; prefer a divisor of n if nearby."""
    nt = max(1, min(n, target_bytes // max(per_sample_bytes, 1)))
    for d in range(nt, max(nt // 2, 1) - 1, -1):
        if n % d == 0:
            return d
    return nt  # ragged last block handled by Pallas masking


@jax.jit
def shrinkage_forward(x, p):
    N, C, L = x.shape
    MIP = (p.shape[1] - 2) // 2
    per_sample_bytes = C * L * jnp.dtype(x.dtype).itemsize
    nt = _pick_nt(N, per_sample_bytes)
    return pl.pallas_call(
        shrinkage_kernel,
        out_shape=jax.ShapeDtypeStruct((N, C, L), x.dtype),
        grid_spec=pltpu.PrefetchScalarGridSpec(
            num_scalar_prefetch=0,
            grid=(pl.cdiv(N, nt),),
            in_specs=[
                pl.BlockSpec((nt, C, L), lambda n: (n, 0, 0)),            # x (pipelined)
                pl.BlockSpec((C + 1, 2 * MIP + 2), lambda n: (0, 0)),     # params (resident)
            ],
            out_specs=pl.BlockSpec((nt, C, L), lambda n: (n, 0, 0)),
        ),
        compiler_params=pltpu.CompilerParams(
            dimension_semantics=("parallel",),          # batch tiles independent (v7x 2-TC)
            vmem_limit_bytes=32 * 1024 * 1024,          # fits v7x 64 MiB / v5e 128 MiB physical
        ),
    )(x, p)


def pack_params(w1, b1, gamma, beta, rmean, rvar, w2, b2, a, eps=1e-5):
    """Fold eval-mode BatchNorm into conv1 and pack everything into ONE small slab."""
    MIP, C = w1.shape
    scale = gamma / jnp.sqrt(rvar + eps)                      # (MIP,)
    w1f = w1 * scale[:, None]                                 # (MIP, C)
    b1f = b1 * scale + (beta - rmean * scale)                 # (MIP,)
    top = jnp.concatenate([w1f.T, w2, b2[:, None], a[:, None]], axis=1)      # (C, 2*MIP+2)
    bottom = jnp.concatenate([b1f, jnp.zeros((MIP + 2,), b1f.dtype)])[None]  # (1, 2*MIP+2)
    return jnp.concatenate([top, bottom], axis=0).astype(jnp.float32)        # (C+1, 2*MIP+2)


def reference_forward(x, w1, b1, gamma, beta, rmean, rvar, w2, b2, a, eps=1e-5):
    """Pure-JAX reference replicating the PyTorch forward (eval-mode BN)."""
    avg = jnp.mean(x, axis=-1, keepdims=True)                 # (N,C,1)
    h = jnp.einsum('oc,ncl->nol', w1, avg) + b1[None, :, None]
    h = (h - rmean[None, :, None]) / jnp.sqrt(rvar[None, :, None] + eps)
    h = h * gamma[None, :, None] + beta[None, :, None]
    h = jnp.maximum(h, 0.0)
    y = jnp.einsum('om,nml->nol', w2, h) + b2[None, :, None]
    y = jnp.clip(y / 6.0 + 0.5, 0.0, 1.0)
    thr = a[None, :, None] * (avg * y)
    return jnp.sign(x) * jnp.maximum(jnp.abs(x) - thr, 0.0)


if __name__ == "__main__":
    # Module config: gap_size=1 (global avg pool), inp=oup=10 (matches the (1,10,1) `a`
    # parameter), reduction=32 -> mip = max(8, 10//32) = 8.
    N, C, L = 2, 10, 16
    MIP = max(8, C // 32)
    EPS = 1e-5

    key = jax.random.PRNGKey(0)
    ks = jax.random.split(key, 8)

    x = jax.random.normal(ks[0], (N, C, L), dtype=jnp.float32)

    # Deterministic synthetic parameters (shapes follow the module).
    w1 = 0.1 * jax.random.normal(ks[1], (MIP, C), dtype=jnp.float32)   # Conv1d(inp,mip,1).weight squeezed
    b1 = 0.1 * jax.random.normal(ks[2], (MIP,), dtype=jnp.float32)
    gamma = 1.0 + 0.1 * jax.random.normal(ks[3], (MIP,), dtype=jnp.float32)
    beta = 0.1 * jax.random.normal(ks[4], (MIP,), dtype=jnp.float32)
    rmean = 0.1 * jax.random.normal(ks[5], (MIP,), dtype=jnp.float32)
    rvar = 1.0 + 0.1 * jax.random.uniform(ks[6], (MIP,), dtype=jnp.float32)
    w2 = 0.1 * jax.random.normal(ks[7], (C, MIP), dtype=jnp.float32)   # Conv1d(mip,oup,1).weight squeezed
    b2 = jnp.zeros((C,), dtype=jnp.float32)
    a = 0.5 * jnp.ones((C,), dtype=jnp.float32)                        # self.a = 0.5*ones(1,10,1)

    p = pack_params(w1, b1, gamma, beta, rmean, rvar, w2, b2, a, EPS)

    out = shrinkage_forward(x, p)
    out = jax.block_until_ready(out)

    ref = reference_forward(x, w1, b1, gamma, beta, rmean, rvar, w2, b2, a, EPS)
    assert out.shape == (N, C, L)
    assert jnp.allclose(out, ref, atol=1e-5, rtol=1e-5), "mismatch vs reference"

    print("KERNEL_OK")
</pallas_src>

<mosaic_0001>
module attributes {stable_mosaic.version = 11 : i64} {
  func.func @shrinkage_kernel(%arg0: i32, %arg1: memref<2x10x16xf32, #tpu.memory_space<vmem>>, %arg2: memref<11x18xf32, #tpu.memory_space<vmem>>, %arg3: memref<2x10x16xf32, #tpu.memory_space<vmem>>) attributes {dimension_semantics = [#tpu.dimension_semantics<parallel>], iteration_bounds = array<i64: 1>, scalar_prefetch = 0 : i64, scratch_operands = 0 : i64, tpu.core_type = #tpu.core_type<tc>, window_params = [{transform_indices = @transform_0, window_bounds = array<i64: 2, 10, 16>}, {pipeline_mode = #tpu.pipeline_mode<synchronous>, transform_indices = @transform_1, window_bounds = array<i64: 11, 18>}, {transform_indices = @transform_2, window_bounds = array<i64: 2, 10, 16>}]} {
    %c0 = arith.constant 0 : index
    %c0_0 = arith.constant 0 : index
    %c0_1 = arith.constant 0 : index
    %0 = vector.load %arg1[%c0, %c0_0, %c0_1] : memref<2x10x16xf32, #tpu.memory_space<vmem>>, vector<2x10x16xf32>
    %cst = arith.constant dense<0.000000e+00> : vector<2x10xf32>
    %1 = vector.multi_reduction <add>, %0, %cst [2] : vector<2x10x16xf32> to vector<2x10xf32>
    %2 = vector.shape_cast %1 : vector<2x10xf32> to vector<2x10x1xf32>
    %cst_2 = arith.constant 1.600000e+01 : f32
    %3 = vector.broadcast %cst_2 : f32 to vector<2x10x1xf32>
    %4 = arith.divf %2, %3 : vector<2x10x1xf32>
    %c0_3 = arith.constant 0 : index
    %c0_4 = arith.constant 0 : index
    %5 = vector.load %arg2[%c0_3, %c0_4] : memref<11x18xf32, #tpu.memory_space<vmem>>, vector<10x8xf32>
    %c10 = arith.constant 10 : index
    %c0_5 = arith.constant 0 : index
    %6 = vector.load %arg2[%c10, %c0_5] : memref<11x18xf32, #tpu.memory_space<vmem>>, vector<1x8xf32>
    %c0_6 = arith.constant 0 : index
    %c8 = arith.constant 8 : index
    %7 = vector.load %arg2[%c0_6, %c8] : memref<11x18xf32, #tpu.memory_space<vmem>>, vector<10x8xf32>
    %c0_7 = arith.constant 0 : index
    %c16 = arith.constant 16 : index
    %8 = vector.load %arg2[%c0_7, %c16] : memref<11x18xf32, #tpu.memory_space<vmem>>, vector<10x1xf32>
    %c0_8 = arith.constant 0 : index
    %c17 = arith.constant 17 : index
    %9 = vector.load %arg2[%c0_8, %c17] : memref<11x18xf32, #tpu.memory_space<vmem>>, vector<10x1xf32>
    %10 = vector.shape_cast %5 : vector<10x8xf32> to vector<1x10x8xf32>
    %11 = vector.broadcast %10 : vector<1x10x8xf32> to vector<2x10x8xf32>
    %12 = vector.broadcast %4 : vector<2x10x1xf32> to vector<2x10x8xf32>
    %13 = arith.mulf %11, %12 : vector<2x10x8xf32>
    %cst_9 = arith.constant dense<0.000000e+00> : vector<2x8xf32>
    %14 = vector.multi_reduction <add>, %13, %cst_9 [1] : vector<2x10x8xf32> to vector<2x8xf32>
    %15 = vector.shape_cast %14 : vector<2x8xf32> to vector<2x1x8xf32>
    %16 = vector.shape_cast %6 : vector<1x8xf32> to vector<1x1x8xf32>
    %17 = vector.broadcast %16 : vector<1x1x8xf32> to vector<2x1x8xf32>
    %18 = arith.addf %15, %17 : vector<2x1x8xf32>
    %cst_10 = arith.constant 0.000000e+00 : f32
    %19 = vector.broadcast %cst_10 : f32 to vector<2x1x8xf32>
    %20 = arith.maximumf %18, %19 : vector<2x1x8xf32>
    %21 = vector.shape_cast %7 : vector<10x8xf32> to vector<1x10x8xf32>
    %22 = vector.broadcast %21 : vector<1x10x8xf32> to vector<2x10x8xf32>
    %23 = vector.broadcast %20 : vector<2x1x8xf32> to vector<2x10x8xf32>
    %24 = arith.mulf %22, %23 : vector<2x10x8xf32>
    %cst_11 = arith.constant dense<0.000000e+00> : vector<2x10xf32>
    %25 = vector.multi_reduction <add>, %24, %cst_11 [2] : vector<2x10x8xf32> to vector<2x10xf32>
    %26 = vector.shape_cast %25 : vector<2x10xf32> to vector<2x10x1xf32>
    %27 = vector.shape_cast %8 : vector<10x1xf32> to vector<1x10x1xf32>
    %28 = vector.broadcast %27 : vector<1x10x1xf32> to vector<2x10x1xf32>
    %29 = arith.addf %26, %28 : vector<2x10x1xf32>
    %cst_12 = arith.constant 0.166666672 : f32
    %30 = vector.broadcast %cst_12 : f32 to vector<2x10x1xf32>
    %31 = arith.mulf %29, %30 : vector<2x10x1xf32>
    %cst_13 = arith.constant 5.000000e-01 : f32
    %32 = vector.broadcast %cst_13 : f32 to vector<2x10x1xf32>
    %33 = arith.addf %31, %32 : vector<2x10x1xf32>
    %cst_14 = arith.constant 0.000000e+00 : f32
    %cst_15 = arith.constant 1.000000e+00 : f32
    %34 = vector.broadcast %cst_14 : f32 to vector<2x10x1xf32>
    %35 = arith.maximumf %34, %33 : vector<2x10x1xf32>
    %36 = vector.broadcast %cst_15 : f32 to vector<2x10x1xf32>
    %37 = arith.minimumf %36, %35 : vector<2x10x1xf32>
    %38 = arith.mulf %4, %37 : vector<2x10x1xf32>
    %39 = vector.shape_cast %9 : vector<10x1xf32> to vector<1x10x1xf32>
    %40 = vector.broadcast %39 : vector<1x10x1xf32> to vector<2x10x1xf32>
    %41 = arith.mulf %40, %38 : vector<2x10x1xf32>
    %42 = math.absf %0 : vector<2x10x16xf32>
    %43 = vector.broadcast %41 : vector<2x10x1xf32> to vector<2x10x16xf32>
    %44 = arith.subf %42, %43 : vector<2x10x16xf32>
    %cst_16 = arith.constant 0.000000e+00 : f32
    %45 = vector.broadcast %cst_16 : f32 to vector<2x10x16xf32>
    %46 = arith.maximumf %44, %45 : vector<2x10x16xf32>
    %cst_17 = arith.constant 0.000000e+00 : f32
    %47 = vector.broadcast %cst_17 : f32 to vector<2x10x16xf32>
    %48 = arith.cmpf ogt, %0, %47 : vector<2x10x16xf32>
    %cst_18 = arith.constant 0.000000e+00 : f32
    %49 = vector.broadcast %cst_18 : f32 to vector<2x10x16xf32>
    %50 = arith.cmpf olt, %0, %49 : vector<2x10x16xf32>
    %cst_19 = arith.constant 0.000000e+00 : f32
    %51 = vector.broadcast %cst_19 : f32 to vector<2x10x16xf32>
    %52 = arith.subf %51, %46 : vector<2x10x16xf32>
    %cst_20 = arith.constant 0.000000e+00 : f32
    %53 = vector.broadcast %cst_20 : f32 to vector<2x10x16xf32>
    %54 = arith.select %50, %52, %53 : vector<2x10x16xi1>, vector<2x10x16xf32>
    %55 = arith.select %48, %46, %54 : vector<2x10x16xi1>, vector<2x10x16xf32>
    %c0_21 = arith.constant 0 : index
    %c0_22 = arith.constant 0 : index
    %c0_23 = arith.constant 0 : index
    %56 = vector.load %arg3[%c0_21, %c0_22, %c0_23] : memref<2x10x16xf32, #tpu.memory_space<vmem>>, vector<2x10x16xf32>
    tpu.vector_store %arg3[%c0_21, %c0_22, %c0_23], %55 {strides = array<i32>} : memref<2x10x16xf32, #tpu.memory_space<vmem>>, vector<2x10x16xf32>,
    return
  }
  func.func @transform_0(%arg0: i32) -> (i32, i32, i32) {
    %c0_i32 = arith.constant 0 : i32
    %c0_i32_0 = arith.constant 0 : i32
    %c0_i32_1 = arith.constant 0 : i32
    return %arg0, %c0_i32, %c0_i32_0 : i32, i32, i32
  }
  func.func @transform_1(%arg0: i32) -> (i32, i32) {
    %c0_i32 = arith.constant 0 : i32
    %c0_i32_0 = arith.constant 0 : i32
    %c0_i32_1 = arith.constant 0 : i32
    return %c0_i32, %c0_i32_0 : i32, i32
  }
  func.func @transform_2(%arg0: i32) -> (i32, i32, i32) {
    %c0_i32 = arith.constant 0 : i32
    %c0_i32_0 = arith.constant 0 : i32
    %c0_i32_1 = arith.constant 0 : i32
    return %arg0, %c0_i32, %c0_i32_0 : i32, i32, i32
  }
}

</mosaic_0001>

<llo_original>
// kernel: shrinkage_forward.1
$region0: #{shrinkage_forward.1}
  #allocation0 [shape = 'u32[]', space=smem, size = 0x4, offset = 0x4, fixed_abs, tag = 'smem constant byte address 0x4 - core index']
  #allocation1 [shape = 'u32[144,128]{1,0:T(1,128)}', space=vmem, size = 0x12000, scoped, tag = 'internal scratch']
  %s0 = inlined_call_operand.vmem [shape: f32[2,10,16], index: 0, kind: input, shape index: {}]
  %s1 = inlined_call_operand.vmem [shape: f32[11,18], index: 1, kind: input, shape index: {}]
  %s2 = inlined_call_operand.vmem [shape: f32[2,10,16], index: 2, kind: output, shape index: {}]
  %s3 = sld [smem:[#allocation0]]
  $region18: #{shrinkage_forward.1} parent=0
    _
  %s5 = ssub.s32 1, %s3
  %s6 = scalar_select 0, %s5, %s3
  // Predicated region
  $region2: #{shrinkage_forward.1} parent=0 // pred_check
    _
  $region3: #{shrinkage_forward.1} parent=0 // pred_check_branch
    %8 = sbr.rel (0) target = $region5
  $region4: #{shrinkage_forward.1} parent=0 // pred_region
    _
  $region5: #{shrinkage_forward.1} parent=0 // pred_fallthru
    _
  // Predicated region
  $region6: #{shrinkage_forward.1} parent=0 // pred_check
    _
  $region7: #{shrinkage_forward.1} parent=0 // pred_check_branch
    %10 = sbr.rel (0) target = $region9
  $region8: #{shrinkage_forward.1} parent=0 // pred_region
    _
  $region9: #{shrinkage_forward.1} parent=0 // pred_fallthru
    _
  %v11 = vld [vmem:[%s0] sm:$0xff]
  %v12 = vld [vmem:[%s0 + $0x8] sm:$0x3]
  %v13 = vld [vmem:[%s0 + $0x10] sm:$0xff]
  %v14 = vld [vmem:[%s0 + $0x18] sm:$0x3]
  %vm15 = vcmask 130048
  %v16 = vsel %vm15, %v11, 0.0
  %17 = vadd.xlane.f32.xlu0 %v16
  %v18 = vpop.xlane.xlu0 %17
  %vm19 = vcmask 123904
  %v20 = vsel %vm19, %v12, 0.0
  %21 = vadd.xlane.f32.xlu0 %v20
  %v22 = vpop.xlane.xlu0 %21
  %v23 = vsel %vm15, %v13, 0.0
  %24 = vadd.xlane.f32.xlu0 %v23
  %v25 = vpop.xlane.xlu0 %24
  %v26 = vsel %vm19, %v14, 0.0
  %27 = vadd.xlane.f32.xlu0 %v26
  %v28 = vpop.xlane.xlu0 %27
  %v29 = vrcp.pop 16.0
  %v30 = vmul.f32 %v18, %v29
  %v31 = vmul.f32 %v22, %v29
  %v32 = vmul.f32 %v25, %v29
  %v33 = vmul.f32 %v28, %v29
  %v34 = vld [vmem:[%s1] sm:$0xff]
  %v35 = vld [vmem:[%s1 + $0x8] sm:$0x3]
  %v36 = vld [vmem:[%s1 + $0xa] sm:$0x1]
  %v37 = vmul.f32 %v34, %v30
  %v38 = vmul.f32 %v35, %v31
  %v39 = vmul.f32 %v34, %v32
  %v40 = vmul.f32 %v35, %v33
  %vm41 = vcmask 64512
  %v42 = vsel %vm41, %v37, 0.0
  %vm43 = vcmask 58368
  %v44 = vsel %vm43, %v38, 0.0
  %v45 = vadd.f32 %v42, %v44
  %v46 = vrot.slane %v45, 4
  %v47 = vadd.f32 %v45, %v46
  %v48 = vrot.slane %v47, 2
  %v49 = vadd.f32 %v47, %v48
  %v50 = vrot.slane %v49, 1
  %v51 = vadd.f32 %v49, %v50
  %v52 = vsel %vm41, %v39, 0.0
  %v53 = vsel %vm43, %v40, 0.0
  %v54 = vadd.f32 %v52, %v53
  %v55 = vrot.slane %v54, 4
  %v56 = vadd.f32 %v54, %v55
  %v57 = vrot.slane %v56, 2
  %v58 = vadd.f32 %v56, %v57
  %v59 = vrot.slane %v58, 1
  %v60 = vadd.f32 %v58, %v59
  %v61 = vadd.f32 %v51, %v36
  %v62 = vadd.f32 %v60, %v36
  %v63 = vmax.f32 %v61, 0.0
  %v64 = vmax.f32 %v62, 0.0
  %v65 = vlaneseq
  %v66 = vshrl.u32 %v65, 7
  %v67 = vsub.s32 0, %v66
  %v68 = vrot.slane %v63, %v67
  %v69 = vlaneseq
  %v70 = vshrl.u32 %v69, 7
  %v71 = vsub.s32 0, %v70
  %v72 = vrot.slane %v64, %v71
  %75 = vrot.lane.b32.xlu0 %v68, 8
  %v76 = vpop.permute.xlu0 %75
  %77 = vrot.lane.b32.xlu0 %v72, 8
  %v78 = vpop.permute.xlu0 %77
  %v81 = vmul.f32 %v34, %v76
  %v82 = vmul.f32 %v35, %v76
  %v83 = vmul.f32 %v34, %v78
  %v84 = vmul.f32 %v35, %v78
  %89 = vrot.lane.b32.xlu0 %v81, 120
  %v90 = vpop.permute.xlu0 %89
  %91 = vrot.lane.b32.xlu0 %v82, 120
  %v92 = vpop.permute.xlu0 %91
  %93 = vrot.lane.b32.xlu0 %v83, 120
  %v94 = vpop.permute.xlu0 %93
  %95 = vrot.lane.b32.xlu0 %v84, 120
  %v96 = vpop.permute.xlu0 %95
  %v101 = vsel %vm41, %v90, 0.0
  %102 = vadd.xlane.f32.xlu0 %v101
  %v103 = vpop.xlane.xlu0 %102
  %v104 = vsel %vm43, %v92, 0.0
  %105 = vadd.xlane.f32.xlu0 %v104
  %v106 = vpop.xlane.xlu0 %105
  %v107 = vsel %vm41, %v94, 0.0
  %108 = vadd.xlane.f32.xlu0 %v107
  %v109 = vpop.xlane.xlu0 %108
  %v110 = vsel %vm43, %v96, 0.0
  %111 = vadd.xlane.f32.xlu0 %v110
  %v112 = vpop.xlane.xlu0 %111
  %v113 = vadd.f32 %v103, %v34
  %v114 = vadd.f32 %v106, %v35
  %v115 = vadd.f32 %v109, %v34
  %v116 = vadd.f32 %v112, %v35
  %v117 = vmul.f32 %v113, 0.16666667
  %v118 = vmul.f32 %v114, 0.16666667
  %v119 = vmul.f32 %v115, 0.16666667
  %v120 = vmul.f32 %v116, 0.16666667
  %v121 = vadd.f32 %v117, 0.5
  %v122 = vadd.f32 %v118, 0.5
  %v123 = vadd.f32 %v119, 0.5
  %v124 = vadd.f32 %v120, 0.5
  %v125 = vmax.f32 %v121, 0.0
  %v126 = vmax.f32 %v122, 0.0
  %v127 = vmax.f32 %v123, 0.0
  %v128 = vmax.f32 %v124, 0.0
  %v129 = vmin.f32 %v125, 1.0
  %v130 = vmin.f32 %v126, 1.0
  %v131 = vmin.f32 %v127, 1.0
  %v132 = vmin.f32 %v128, 1.0
  %v133 = vmul.f32 %v30, %v129
  %v134 = vmul.f32 %v31, %v130
  %v135 = vmul.f32 %v32, %v131
  %v136 = vmul.f32 %v33, %v132
  %141 = vrot.lane.b32.xlu0 %v133, 1
  %v142 = vpop.permute.xlu0 %141
  %143 = vrot.lane.b32.xlu0 %v134, 1
  %v144 = vpop.permute.xlu0 %143
  %145 = vrot.lane.b32.xlu0 %v135, 1
  %v146 = vpop.permute.xlu0 %145
  %147 = vrot.lane.b32.xlu0 %v136, 1
  %v148 = vpop.permute.xlu0 %147
  %v153 = vmul.f32 %v34, %v142
  %v154 = vmul.f32 %v35, %v144
  %v155 = vmul.f32 %v34, %v146
  %v156 = vmul.f32 %v35, %v148
  %v157 = vand.u32 2147483647, %v11
  %v158 = vand.u32 2147483647, %v12
  %v159 = vand.u32 2147483647, %v13
  %v160 = vand.u32 2147483647, %v14
  %162 = vset.pattern.permute.xlu0 17
  %163 = vperm.xlu0 %162, %v153
  %v164 = vpop.permute.xlu0 %163
  %167 = vset.pattern.permute.xlu0 17
  %168 = vperm.xlu0 %167, %v154
  %v169 = vpop.permute.xlu0 %168
  %172 = vset.pattern.permute.xlu0 17
  %173 = vperm.xlu0 %172, %v155
  %v174 = vpop.permute.xlu0 %173
  %177 = vset.pattern.permute.xlu0 17
  %178 = vperm.xlu0 %177, %v156
  %v179 = vpop.permute.xlu0 %178
  %v181 = vsub.f32 %v157, %v164
  %v182 = vsub.f32 %v158, %v169
  %v183 = vsub.f32 %v159, %v174
  %v184 = vsub.f32 %v160, %v179
  %v185 = vmax.f32 %v181, 0.0
  %v186 = vmax.f32 %v182, 0.0
  %v187 = vmax.f32 %v183, 0.0
  %v188 = vmax.f32 %v184, 0.0
  %vm189 = vcmp.gt.f32.partialorder %v11, 0.0
  %vm190 = vcmp.gt.f32.partialorder %v12, 0.0
  %vm191 = vcmp.gt.f32.partialorder %v13, 0.0
  %vm192 = vcmp.gt.f32.partialorder %v14, 0.0
  %vm193 = vcmp.lt.f32.partialorder %v11, 0.0
  %vm194 = vcmp.lt.f32.partialorder %v12, 0.0
  %vm195 = vcmp.lt.f32.partialorder %v13, 0.0
  %vm196 = vcmp.lt.f32.partialorder %v14, 0.0
  %v197 = vsub.f32 0.0, %v185
  %v198 = vsub.f32 0.0, %v186
  %v199 = vsub.f32 0.0, %v187
  %v200 = vsub.f32 0.0, %v188
  %v201 = vsel %vm193, %v197, 0.0
  %v202 = vsel %vm194, %v198, 0.0
  %v203 = vsel %vm195, %v199, 0.0
  %v204 = vsel %vm196, %v200, 0.0
  %v205 = vsel %vm189, %v185, %v201
  %v206 = vsel %vm190, %v186, %v202
  %v207 = vsel %vm191, %v187, %v203
  %v208 = vsel %vm192, %v188, %v204
  %209 = vst.msk [vmem:[%s2] sm:$0xff] %vm15, %v205
  %210 = vst.msk [vmem:[%s2 + $0x8] sm:$0x3] %vm19, %v206
  %211 = vst.msk [vmem:[%s2 + $0x10] sm:$0xff] %vm15, %v207
  %212 = vst.msk [vmem:[%s2 + $0x18] sm:$0x3] %vm19, %v208
  // Predicated region
  $region10: #{shrinkage_forward.1} parent=0 // pred_check
    _
  $region11: #{shrinkage_forward.1} parent=0 // pred_check_branch
    %214 = sbr.rel (0) target = $region13
  $region12: #{shrinkage_forward.1} parent=0 // pred_region
    _
  $region13: #{shrinkage_forward.1} parent=0 // pred_fallthru
    _
  // Predicated region
  $region14: #{shrinkage_forward.1} parent=0 // pred_check
    _
  $region15: #{shrinkage_forward.1} parent=0 // pred_check_branch
    %216 = sbr.rel (0) target = $region17
  $region16: #{shrinkage_forward.1} parent=0 // pred_region
    _
  $region17: #{shrinkage_forward.1} parent=0 // pred_fallthru
    _

</llo_original>
